<compile_context>
chip_gen: v7x
topology: tpu7x:2x2x1
jax: 0.10.0
libtpu: 0.0.40
codegen_flags: <defaults>
</compile_context>

<pallas_src>
import functools

import jax
import jax.numpy as jnp
from jax import lax
from jax.experimental import pallas as pl
from jax.experimental.pallas import tpu as pltpu


def _focal_pow(base, gamma):
    """(1 - pt) ** gamma, specialized to a multiply chain for integer gamma."""
    g = float(gamma)
    if g.is_integer() and 0 <= int(g) <= 8:
        gi = int(g)
        if gi == 0:
            return jnp.ones_like(base)
        out = base
        for _ in range(gi - 1):
            out = out * base
        return out
    # fractional gamma: clamp keeps log of a tiny negative from producing NaN
    return jnp.power(jnp.maximum(base, 0.0), g)


def _focal_kernel(x_ref, t_ref, a_ref, out_ref, *, gamma, hw, tile_hw,
                  use_alpha):
    j = pl.program_id(1)

    x = x_ref[0].astype(jnp.float32)       # (C, T) logits, classes on sublanes
    t = t_ref[0]                           # (1, T) int32 targets, lane-dense

    c, tt = x.shape

    # log-softmax over the class (sublane) axis, numerically stable
    m = jnp.max(x, axis=0, keepdims=True)                             # (1, T)
    shifted = x - m                                                   # (C, T)
    lse = jnp.log(jnp.sum(jnp.exp(shifted), axis=0, keepdims=True))   # (1, T)

    # gather the target class via a one-hot over sublanes (C is small)
    cls = lax.broadcasted_iota(jnp.int32, (c, tt), 0)                 # (C, T)
    onehot = (cls == t).astype(jnp.float32)                           # (C, T)
    logpt = jnp.sum(shifted * onehot, axis=0, keepdims=True) - lse    # (1, T)

    if use_alpha:
        a = a_ref[...].astype(jnp.float32)                            # (C, 1)
        at = jnp.sum(a * onehot, axis=0, keepdims=True)               # (1, T)
        logpt_w = logpt * at
    else:
        logpt_w = logpt

    pt = jnp.exp(logpt)
    one_minus_pt = jnp.maximum(1.0 - pt, 0.0)
    loss = -1.0 * _focal_pow(one_minus_pt, gamma) * logpt_w           # (1, T)

    # mask lanes past the end of the spatial axis (last block may read OOB);
    # this must stay a select so garbage rows cannot propagate NaN/Inf.
    hw_idx = j * tile_hw + lax.broadcasted_iota(jnp.int32, (1, tt), 1)
    loss = jnp.where(hw_idx < hw, loss, 0.0)

    # per-tile partial sum -> lane 0 of this grid cell's private (1, 128) block
    partial = jnp.sum(loss, axis=1, keepdims=True)                    # (1, 1)
    lane = lax.broadcasted_iota(jnp.int32, (1, 128), 1)
    out_ref[...] = jnp.where(lane == 0, partial, 0.0)


def _pick_tile_hw(hw, c, x_itemsize, vmem_budget_bytes=20 * 1024 * 1024):
    """Largest spatial tile whose double-buffered inputs plus f32 intermediates
    fit the VMEM budget (sized conservatively for v7x's 64 MiB VMEM)."""
    per_lane = (2 * (c * x_itemsize + 4)   # 2x double-buffered logits + targets
                + 8 * c * 4                # ~8 (C, T) f32 intermediates
                + 8 * 4)                   # a few (1, T) f32 temporaries
    max_lanes = max(128, vmem_budget_bytes // per_lane)
    if hw <= max_lanes:
        return hw                          # full extent is always a legal block
    return max(128, (max_lanes // 128) * 128)


def focal_loss(logits, target, *, gamma=2.0, alpha=None, size_average=True,
               tile_hw=None):
    """Pallas TPU implementation of FocalLoss.forward.

    logits: (N, C, *spatial) or (M, C) float array (f32 or bf16)
    target: (N, *spatial) or (M,) integer class indices in [0, C)
    returns: scalar float32 loss
    """
    if logits.ndim > 2:
        n, c = logits.shape[0], logits.shape[1]
        x = logits.reshape(n, c, -1)                 # (N, C, HW) -- free reshape
        hw = x.shape[2]
    else:
        # TODO(synk): the 2-D (M, C) path needs one explicit transpose to put
        # rows on lanes; the main NCHW path avoids any HBM materialization.
        c = logits.shape[1]
        x = jnp.transpose(logits)[None]              # (1, C, M)
        n, hw = 1, logits.shape[0]
    t = target.reshape(n, 1, hw).astype(jnp.int32)   # (N, 1, HW)
    m_total = n * hw

    # per-class alpha vector (ones == no alpha weighting)
    use_alpha = alpha is not None
    if use_alpha:
        if isinstance(alpha, (float, int)):
            alpha = [float(alpha), 1.0 - float(alpha)]
        a = jnp.asarray(alpha, jnp.float32).reshape(-1, 1)   # (C, 1)
        assert a.shape[0] == c, "alpha length must match number of classes"
    else:
        a = jnp.ones((c, 1), jnp.float32)

    if tile_hw is None:
        tile_hw = _pick_tile_hw(hw, c, jnp.dtype(x.dtype).itemsize)
    num_tiles = (hw + tile_hw - 1) // tile_hw
    grid = (n, num_tiles)
    out_lanes = n * num_tiles * 128

    kernel = functools.partial(_focal_kernel, gamma=float(gamma), hw=hw,
                               tile_hw=tile_hw, use_alpha=use_alpha)

    cost = pl.CostEstimate(
        flops=10 * m_total * c,
        transcendentals=m_total * (c + 2),
        bytes_accessed=(m_total * c * jnp.dtype(x.dtype).itemsize
                        + m_total * 4 + out_lanes * 4))

    partials = pl.pallas_call(
        kernel,
        out_shape=jax.ShapeDtypeStruct((1, out_lanes), jnp.float32),
        grid_spec=pltpu.PrefetchScalarGridSpec(
            num_scalar_prefetch=0,
            grid=grid,
            in_specs=[
                pl.BlockSpec((1, c, tile_hw), lambda i, j: (i, 0, j)),  # logits
                pl.BlockSpec((1, 1, tile_hw), lambda i, j: (i, 0, j)),  # targets
                pl.BlockSpec((c, 1), lambda i, j: (0, 0)),              # alpha
            ],
            out_specs=pl.BlockSpec(
                (1, 128), lambda i, j: (0, i * num_tiles + j)),
        ),
        compiler_params=pltpu.CompilerParams(
            dimension_semantics=("parallel", "parallel"),
            vmem_limit_bytes=48 * 1024 * 1024),
        cost_estimate=cost,
    )(x, t, a)

    total = jnp.sum(partials)
    if size_average:
        return total / jnp.float32(m_total)
    return total


def _focal_loss_ref(logits, target, gamma=2.0, alpha=None, size_average=True):
    """Pure-JAX reference mirroring the PyTorch module."""
    if logits.ndim > 2:
        n, c = logits.shape[0], logits.shape[1]
        x = jnp.transpose(logits.reshape(n, c, -1), (0, 2, 1)).reshape(-1, c)
    else:
        x = logits
        c = x.shape[1]
    t = target.reshape(-1).astype(jnp.int32)
    logp = jax.nn.log_softmax(x.astype(jnp.float32), axis=-1)
    logpt = jnp.take_along_axis(logp, t[:, None], axis=1)[:, 0]
    pt = jnp.exp(logpt)
    if alpha is not None:
        if isinstance(alpha, (float, int)):
            alpha = [float(alpha), 1.0 - float(alpha)]
        at = jnp.asarray(alpha, jnp.float32)[t]
        logpt = logpt * at
    loss = -1.0 * (1.0 - pt) ** gamma * logpt
    return loss.mean() if size_average else loss.sum()


if __name__ == "__main__":
    key = jax.random.PRNGKey(0)
    k1, k2 = jax.random.split(key)

    N, C, H, W = 2, 4, 16, 16
    x = jax.random.normal(k1, (N, C, H, W), dtype=jnp.float32)
    target = jax.random.randint(k2, (N, H, W), 0, C, dtype=jnp.int32)

    # default config: gamma=2 (integer fast path), no alpha, mean reduction
    loss = focal_loss(x, target, gamma=2.0, alpha=None, size_average=True)
    loss = jax.block_until_ready(loss)
    ref = _focal_loss_ref(x, target, gamma=2.0, alpha=None, size_average=True)
    assert jnp.allclose(loss, ref, rtol=1e-5, atol=1e-5), (loss, ref)

    # alpha-weighted, sum reduction
    alpha = [0.1, 0.2, 0.3, 0.4]
    loss_a = focal_loss(x, target, gamma=2.0, alpha=alpha, size_average=False)
    loss_a = jax.block_until_ready(loss_a)
    ref_a = _focal_loss_ref(x, target, gamma=2.0, alpha=alpha,
                            size_average=False)
    assert jnp.allclose(loss_a, ref_a, rtol=1e-5, atol=1e-5), (loss_a, ref_a)

    print("KERNEL_OK")
</pallas_src>

<mosaic_0001>
module attributes {stable_mosaic.version = 11 : i64} {
  func.func @_focal_kernel(%arg0: i32, %arg1: i32, %arg2: memref<1x4x256xf32, #tpu.memory_space<vmem>>, %arg3: memref<1x1x256xi32, #tpu.memory_space<vmem>>, %arg4: memref<4x1xf32, #tpu.memory_space<vmem>>, %arg5: memref<1x128xf32, #tpu.memory_space<vmem>>) attributes {dimension_semantics = [#tpu.dimension_semantics<parallel>, #tpu.dimension_semantics<parallel>], iteration_bounds = array<i64: 2, 1>, scalar_prefetch = 0 : i64, scratch_operands = 0 : i64, tpu.core_type = #tpu.core_type<tc>, window_params = [{transform_indices = @transform_0, window_bounds = array<i64: 1, 4, 256>}, {transform_indices = @transform_1, window_bounds = array<i64: 1, 1, 256>}, {pipeline_mode = #tpu.pipeline_mode<synchronous>, transform_indices = @transform_2, window_bounds = array<i64: 4, 1>}, {transform_indices = @transform_3, window_bounds = array<i64: 1, 128>}]} {
    %c0 = arith.constant 0 : index
    %c0_0 = arith.constant 0 : index
    %c0_1 = arith.constant 0 : index
    %0 = vector.load %arg2[%c0, %c0_0, %c0_1] : memref<1x4x256xf32, #tpu.memory_space<vmem>>, vector<1x4x256xf32>
    %1 = vector.shape_cast %0 : vector<1x4x256xf32> to vector<4x256xf32>
    %c0_2 = arith.constant 0 : index
    %c0_3 = arith.constant 0 : index
    %c0_4 = arith.constant 0 : index
    %2 = vector.load %arg3[%c0_2, %c0_3, %c0_4] : memref<1x1x256xi32, #tpu.memory_space<vmem>>, vector<1x1x256xi32>
    %3 = vector.shape_cast %2 : vector<1x1x256xi32> to vector<1x256xi32>
    %cst = arith.constant dense<0xFF800000> : vector<256xf32>
    %4 = vector.multi_reduction <maximumf>, %1, %cst [0] : vector<4x256xf32> to vector<256xf32>
    %5 = vector.shape_cast %4 : vector<256xf32> to vector<1x256xf32>
    %6 = vector.broadcast %5 : vector<1x256xf32> to vector<4x256xf32>
    %7 = arith.subf %1, %6 : vector<4x256xf32>
    %8 = math.exp %7 : vector<4x256xf32>
    %cst_5 = arith.constant dense<0.000000e+00> : vector<256xf32>
    %9 = vector.multi_reduction <add>, %8, %cst_5 [0] : vector<4x256xf32> to vector<256xf32>
    %10 = vector.shape_cast %9 : vector<256xf32> to vector<1x256xf32>
    %11 = math.log %10 : vector<1x256xf32>
    %12 = tpu.iota {dimensions = array<i32: 0>} : vector<4x256xi32>
    %13 = vector.broadcast %3 : vector<1x256xi32> to vector<4x256xi32>
    %14 = arith.cmpi eq, %12, %13 : vector<4x256xi32>
    %15 = arith.extui %14 : vector<4x256xi1> to vector<4x256xi32>
    %16 = arith.sitofp %15 : vector<4x256xi32> to vector<4x256xf32>
    %17 = arith.mulf %7, %16 : vector<4x256xf32>
    %cst_6 = arith.constant dense<0.000000e+00> : vector<256xf32>
    %18 = vector.multi_reduction <add>, %17, %cst_6 [0] : vector<4x256xf32> to vector<256xf32>
    %19 = vector.shape_cast %18 : vector<256xf32> to vector<1x256xf32>
    %20 = arith.subf %19, %11 : vector<1x256xf32>
    %21 = math.exp %20 : vector<1x256xf32>
    %cst_7 = arith.constant 1.000000e+00 : f32
    %22 = vector.broadcast %cst_7 : f32 to vector<1x256xf32>
    %23 = arith.subf %22, %21 : vector<1x256xf32>
    %cst_8 = arith.constant 0.000000e+00 : f32
    %24 = vector.broadcast %cst_8 : f32 to vector<1x256xf32>
    %25 = arith.maximumf %23, %24 : vector<1x256xf32>
    %26 = arith.mulf %25, %25 : vector<1x256xf32>
    %cst_9 = arith.constant -1.000000e+00 : f32
    %27 = vector.broadcast %cst_9 : f32 to vector<1x256xf32>
    %28 = arith.mulf %27, %26 : vector<1x256xf32>
    %29 = arith.mulf %28, %20 : vector<1x256xf32>
    %c256_i32 = arith.constant 256 : i32
    %30 = arith.muli %arg1, %c256_i32 : i32
    %31 = tpu.iota {dimensions = array<i32: 1>} : vector<1x256xi32>
    %32 = vector.broadcast %30 : i32 to vector<1x256xi32>
    %33 = arith.addi %32, %31 : vector<1x256xi32>
    %c256_i32_10 = arith.constant 256 : i32
    %34 = vector.broadcast %c256_i32_10 : i32 to vector<1x256xi32>
    %35 = arith.cmpi slt, %33, %34 : vector<1x256xi32>
    %cst_11 = arith.constant 0.000000e+00 : f32
    %36 = vector.broadcast %cst_11 : f32 to vector<1x256xf32>
    %37 = arith.select %35, %29, %36 : vector<1x256xi1>, vector<1x256xf32>
    %cst_12 = arith.constant dense<0.000000e+00> : vector<1xf32>
    %38 = vector.multi_reduction <add>, %37, %cst_12 [1] : vector<1x256xf32> to vector<1xf32>
    %39 = vector.shape_cast %38 : vector<1xf32> to vector<1x1xf32>
    %40 = tpu.iota {dimensions = array<i32: 1>} : vector<1x128xi32>
    %c0_i32 = arith.constant 0 : i32
    %41 = vector.broadcast %c0_i32 : i32 to vector<1x128xi32>
    %42 = arith.cmpi eq, %40, %41 : vector<1x128xi32>
    %cst_13 = arith.constant 0.000000e+00 : f32
    %43 = vector.shape_cast %39 : vector<1x1xf32> to vector<1x1xf32>
    %44 = vector.broadcast %43 : vector<1x1xf32> to vector<1x128xf32>
    %45 = vector.broadcast %cst_13 : f32 to vector<1x128xf32>
    %46 = arith.select %42, %44, %45 : vector<1x128xi1>, vector<1x128xf32>
    %c0_14 = arith.constant 0 : index
    %c0_15 = arith.constant 0 : index
    %47 = vector.load %arg5[%c0_14, %c0_15] : memref<1x128xf32, #tpu.memory_space<vmem>>, vector<1x128xf32>
    tpu.vector_store %arg5[%c0_14, %c0_15], %46 {strides = array<i32>} : memref<1x128xf32, #tpu.memory_space<vmem>>, vector<1x128xf32>,
    return
  }
  func.func @transform_0(%arg0: i32, %arg1: i32) -> (i32, i32, i32) {
    %c0_i32 = arith.constant 0 : i32
    %c0_i32_0 = arith.constant 0 : i32
    return %arg0, %c0_i32, %arg1 : i32, i32, i32
  }
  func.func @transform_1(%arg0: i32, %arg1: i32) -> (i32, i32, i32) {
    %c0_i32 = arith.constant 0 : i32
    %c0_i32_0 = arith.constant 0 : i32
    return %arg0, %c0_i32, %arg1 : i32, i32, i32
  }
  func.func @transform_2(%arg0: i32, %arg1: i32) -> (i32, i32) {
    %c0_i32 = arith.constant 0 : i32
    %c0_i32_0 = arith.constant 0 : i32
    %c0_i32_1 = arith.constant 0 : i32
    return %c0_i32, %c0_i32_0 : i32, i32
  }
  func.func @transform_3(%arg0: i32, %arg1: i32) -> (i32, i32) {
    %c1_i32 = arith.constant 1 : i32
    %0 = arith.muli %arg0, %c1_i32 : i32
    %1 = arith.addi %0, %arg1 : i32
    %c0_i32 = arith.constant 0 : i32
    %c0_i32_0 = arith.constant 0 : i32
    return %c0_i32, %1 : i32, i32
  }
}

</mosaic_0001>

<llo_original>
// kernel: tpu_custom_call.1
$region0: #{tpu_custom_call.1}
  #allocation0 [shape = 'u32[]', space=smem, size = 0x4, offset = 0x4, fixed_abs, tag = 'smem constant byte address 0x4 - core index']
  #allocation1 [shape = 'u32[144,128]{1,0:T(1,128)}', space=vmem, size = 0x12000, scoped, tag = 'internal scratch']
  %s0 = inlined_call_operand.hbm [shape: f32[2,4,256], index: 0, kind: input, shape index: {}]
  %s1 = inlined_call_operand.vmem [shape: s32[2,1,256], index: 1, kind: input, shape index: {}]
  %s2 = inlined_call_operand.vmem [shape: f32[4,1], index: 2, kind: input, shape index: {}]
  %s3 = inlined_call_operand.hbm [shape: f32[1,256], index: 3, kind: output, shape index: {}]
  %s4 = sld [smem:[#allocation0]]
  $region49: #{tpu_custom_call.1} parent=0
    _
  %s6 = ssub.s32 1, %s4
  %s7 = scalar_select 0, %s6, %s4
  $region1: #{tpu_custom_call.1} parent=0
    #allocation2 [shape = 'u8[8192]{0}', space=vmem, size = 0x2000, scoped, tag = 'input window, operand 0']
    #allocation3 [shape = 's32[2]{0}', space=sflag, size = 0x8, scoped, tag = 'scoped memory for tpu_custom_call.1']
    #allocation4 [shape = 's32[2]{0}', space=sflag, size = 0x8, scoped, tag = 'scoped memory for tpu_custom_call.1']
    #allocation5 [shape = 'u8[1024]{0}', space=vmem, size = 0x400, scoped, tag = 'output window, operand 0']
    %8 = vsyncpa [#allocation3], 0
    %s9 = scalar_lea.sflag [#allocation3], 1
    %10 = vsyncpa %s9, 0
    %11 = vsyncpa [#allocation4], 0
    %s12 = scalar_lea.sflag [#allocation4], 1
    %13 = vsyncpa %s12, 0
    loop: start=0, step=1, limit=4
    $region2: #{tpu_custom_call.1} parent=1 // loop_pre_header
      _
    $region3: #{tpu_custom_call.1} parent=1 // loop_header
      %s15 = sphi 0, %s19
      %p16 = scmp.ge.s32.totalorder %s15, 4
      %s22 = sphi 0, %s34
      %s23 = sphi 0, %s30
      %s24 = sphi 0, %s22
      %s25 = sphi 0, %s23
      %s26 = sphi 0, %s24
      %s27 = sphi 0, %s25
      %s39 = sphi 0, %s41
      %s42 = sphi 0, %s39
      %s43 = sphi 0, %s42
      %s59 = sphi 0, %s43
      %s67 = sphi 0, %s69
      %s70 = sphi 0, %s67
      %s71 = sphi 0, %s70
      %s87 = sphi 0, %s71
      %s91 = sphi 0, %s91
      %s93 = sphi 0, %s91
      %s94 = sphi 0, %s93
      %s108 = sphi 0, %s94
      %s116 = sphi 0, %s118
      %s119 = sphi 0, %s116
      %s120 = sphi 0, %s119
      %s136 = sphi 0, %s120
    $region4: #{tpu_custom_call.1} parent=1 // loop_header_branch
      %18 = sbr.rel (%p16) target = $region8
    $region5: #{tpu_custom_call.1} parent=1 // loop_body
      %s20 = ssub.s32 %s15, 1
      %s21 = ssub.s32 %s15, 2
      %s28 = sadd.s32 1, %s23
      %p29 = scmp.ge.s32.totalorder %s28, 1
      %s30 = scalar_select %p29, 0, %s28
      %s31 = sadd.s32 1, %s22
      %s32 = scalar_select %p29, %s31, %s22
      %p33 = scmp.ge.s32.totalorder %s32, 2
      %s34 = scalar_select %p33, 0, %s32
      %s35 = ssub.s32 %s22, %s34
      %s36 = ssub.s32 %s23, %s30
      %s37 = sor.u32 %s35, %s36
      %p38 = scmp.eq.s32.totalorder %s37, 0
      %s40 = sadd.s32 %s39, 1
      %s41 = scalar_select %p38, %s39, %s40
      %p44 = pneg %p38
      %p45 = scmp.eq.s32.totalorder %s15, 1
      %p46 = por %p44, %p45
      %p47 = scmp.ne.s32.totalorder %s39, %s42
      %p48 = scmp.eq.s32.totalorder %s15, 0
      %p49 = por %p47, %p48
      %p50 = scmp.ne.s32.totalorder %s39, %s42
      %p51 = scmp.eq.s32.totalorder %s20, 1
      %p52 = por %p50, %p51
      %p53 = scmp.ne.s32.totalorder %s42, %s43
      %p54 = scmp.eq.s32.totalorder %s20, 0
      %p55 = por %p53, %p54
      %p56 = scmp.ne.s32.totalorder %s42, %s43
      %p57 = scmp.eq.s32.totalorder %s21, 1
      %p58 = por %p56, %p57
      %p60 = scmp.ne.s32.totalorder %s43, %s59
      %p61 = scmp.eq.s32.totalorder %s21, 0
      %p62 = por %p60, %p61
      %s63 = ssub.s32 %s22, %s34
      %s64 = ssub.s32 %s23, %s30
      %s65 = sor.u32 %s63, %s64
      %p66 = scmp.eq.s32.totalorder %s65, 0
      %s68 = sadd.s32 %s67, 1
      %s69 = scalar_select %p66, %s67, %s68
      %p72 = pneg %p66
      %p73 = scmp.eq.s32.totalorder %s15, 1
      %p74 = por %p72, %p73
      %p75 = scmp.ne.s32.totalorder %s67, %s70
      %p76 = scmp.eq.s32.totalorder %s15, 0
      %p77 = por %p75, %p76
      %p78 = scmp.ne.s32.totalorder %s67, %s70
      %p79 = scmp.eq.s32.totalorder %s20, 1
      %p80 = por %p78, %p79
      %p81 = scmp.ne.s32.totalorder %s70, %s71
      %p82 = scmp.eq.s32.totalorder %s20, 0
      %p83 = por %p81, %p82
      %p84 = scmp.ne.s32.totalorder %s70, %s71
      %p85 = scmp.eq.s32.totalorder %s21, 1
      %p86 = por %p84, %p85
      %p88 = scmp.ne.s32.totalorder %s71, %s87
      %p89 = scmp.eq.s32.totalorder %s21, 0
      %p90 = por %p88, %p89
      %s92 = sadd.s32 %s91, 1
      %p95 = scmp.eq.s32.totalorder %s15, 1
      %p96 = scmp.ne.s32.totalorder %s91, %s93
      %p97 = scmp.eq.s32.totalorder %s15, 0
      %p98 = por %p96, %p97
      %p99 = scmp.ne.s32.totalorder %s91, %s93
      %p100 = scmp.eq.s32.totalorder %s20, 1
      %p101 = por %p99, %p100
      %p102 = scmp.ne.s32.totalorder %s93, %s94
      %p103 = scmp.eq.s32.totalorder %s20, 0
      %p104 = por %p102, %p103
      %p105 = scmp.ne.s32.totalorder %s93, %s94
      %p106 = scmp.eq.s32.totalorder %s21, 1
      %p107 = por %p105, %p106
      %p109 = scmp.ne.s32.totalorder %s94, %s108
      %p110 = scmp.eq.s32.totalorder %s21, 0
      %p111 = por %p109, %p110
      %s112 = sadd.s32 %s22, %s23
      %s113 = sadd.s32 %s34, %s30
      %s114 = ssub.s32 %s112, %s113
      %p115 = scmp.eq.s32.totalorder %s114, 0
      %s117 = sadd.s32 %s116, 1
      %s118 = scalar_select %p115, %s116, %s117
      %p121 = pneg %p115
      %p122 = scmp.eq.s32.totalorder %s15, 1
      %p123 = por %p121, %p122
      %p124 = scmp.ne.s32.totalorder %s116, %s119
      %p125 = scmp.eq.s32.totalorder %s15, 0
      %p126 = por %p124, %p125
      %p127 = scmp.ne.s32.totalorder %s116, %s119
      %p128 = scmp.eq.s32.totalorder %s20, 1
      %p129 = por %p127, %p128
      %p130 = scmp.ne.s32.totalorder %s119, %s120
      %p131 = scmp.eq.s32.totalorder %s20, 0
      %p132 = por %p130, %p131
      %p133 = scmp.ne.s32.totalorder %s119, %s120
      %p134 = scmp.eq.s32.totalorder %s21, 1
      %p135 = por %p133, %p134
      %p137 = scmp.ne.s32.totalorder %s120, %s136
      %p138 = scmp.eq.s32.totalorder %s21, 0
      %p139 = por %p137, %p138
      %p140 = scmp.le.s32.totalorder 1, %s15
      %p141 = scmp.lt.s32.totalorder %s15, 3
      %p142 = pnand %p140, %p141
      %p143 = pneg %p142
      // Predicated region
      $region9: #{tpu_custom_call.1} parent=5 // pred_check
        _
      $region10: #{tpu_custom_call.1} parent=5 // pred_check_branch
        %145 = sbr.rel (%p142) target = $region12
      $region11: #{tpu_custom_call.1} parent=5 // pred_region
        %s146 = ssub.s32 %s15, 1
        // Predicated region
        $region13: #{tpu_custom_call.1} parent=11 // pred_check
          %p147 = pneg %p104
        $region14: #{tpu_custom_call.1} parent=11 // pred_check_branch
          %149 = sbr.rel (%p147) target = $region16
        $region15: #{tpu_custom_call.1} parent=11 // pred_region
          _
        $region16: #{tpu_custom_call.1} parent=11 // pred_fallthru
          _
      $region12: #{tpu_custom_call.1} parent=5 // pred_fallthru
        _
      %p150 = scmp.lt.s32.totalorder %s15, 2
      // Predicated region
      $region17: #{tpu_custom_call.1} parent=5 // pred_check
        %p151 = pneg %p150
      $region18: #{tpu_custom_call.1} parent=5 // pred_check_branch
        %153 = sbr.rel (%p151) target = $region20
      $region19: #{tpu_custom_call.1} parent=5 // pred_region
        // Predicated region
        $region21: #{tpu_custom_call.1} parent=19 // pred_check
          %p154 = pneg %p49
        $region22: #{tpu_custom_call.1} parent=19 // pred_check_branch
          %156 = sbr.rel (%p154) target = $region24
        $region23: #{tpu_custom_call.1} parent=19 // pred_region
          %s157 = sand.u32 %s39, 1
          %s158 = scalar_lea.sflag [#allocation3], %s157
          %s159 = sand.u32 %s39, 1
          %s160 = smul.addr %s159, 8
          %s161 = scalar_lea.vmem [#allocation2], %s160
          %s162 = smul.u32 2, %s23
          %s164 = ssub.s32 128, 128
          %165 = vsyncadd %s158, %s164
          %s166 = smul.addr %s22, 2
          %s167 = sadd.s32 %s162, %s166
          %s168 = smul.addr %s167, 64
          %s169 = scalar_lea.hbm %s0, %s168
          %s171 = sshll.u32 %s161, 4
          %s172 = int_to_ptr.vmem [resolvable:$true] %s171
          %174 = dma.hbm_to_vmem [thread:$0]  %s169, 128, %s172, %s158
        $region24: #{tpu_custom_call.1} parent=19 // pred_fallthru
          _
        // Predicated region
        $region25: #{tpu_custom_call.1} parent=19 // pred_check
          %p175 = pneg %p77
        $region26: #{tpu_custom_call.1} parent=19 // pred_check_branch
          %177 = sbr.rel (%p175) target = $region28
        $region27: #{tpu_custom_call.1} parent=19 // pred_region
          %s178 = smul.u32 2, %s23
          %p179 = scmp.lt.s32.totalorder %s22, 1
          %s180 = scalar_select %p179, %s22, 1
          %p181 = scmp.lt.s32.totalorder %s178, 1
          %s182 = scalar_select %p181, %s178, 1
          %s183 = smul.addr %s180, 2
          %s184 = sadd.s32 %s182, %s183
          %s185 = scalar_lea.vmem %s1, %s184
          %s186 = smul.u32 2, %s23
        $region28: #{tpu_custom_call.1} parent=19 // pred_fallthru
          _
      $region20: #{tpu_custom_call.1} parent=5 // pred_fallthru
        _
      %p187 = scmp.le.s32.totalorder 1, %s15
      %p188 = scmp.lt.s32.totalorder %s15, 3
      %p189 = pnand %p187, %p188
      %p190 = pneg %p189
      // Predicated region
      $region29: #{tpu_custom_call.1} parent=5 // pred_check
        _
      $region30: #{tpu_custom_call.1} parent=5 // pred_check_branch
        %192 = sbr.rel (%p189) target = $region32
      $region31: #{tpu_custom_call.1} parent=5 // pred_region
        %s193 = ssub.s32 %s15, 1
        %s194 = sand.u32 %s42, 1
        %s195 = scalar_lea.sflag [#allocation3], %s194
        %s196 = sand.u32 %s42, 1
        %s197 = smul.addr %s196, 8
        %s198 = scalar_lea.vmem [#allocation2], %s197
        // Predicated region
        $region33: #{tpu_custom_call.1} parent=31 // pred_check
          %p199 = pneg %p55
        $region34: #{tpu_custom_call.1} parent=31 // pred_check_branch
          %201 = sbr.rel (%p199) target = $region36
        $region35: #{tpu_custom_call.1} parent=31 // pred_region
          %202 = dma.done %s195, 128
        $region36: #{tpu_custom_call.1} parent=31 // pred_fallthru
          _
        %s203 = sand.u32 %s42, 1
        %s204 = scalar_lea.sflag [#allocation3], %s203
        %s205 = sand.u32 %s42, 1
        %s206 = smul.addr %s205, 8
        %s207 = scalar_lea.vmem [#allocation2], %s206
        %p208 = pneg %p55
        %p209 = pneg %p52
        %s210 = smul.u32 2, %s25
        %p211 = scmp.lt.s32.totalorder %s24, 1
        %s212 = scalar_select %p211, %s24, 1
        %p213 = scmp.lt.s32.totalorder %s210, 1
        %s214 = scalar_select %p213, %s210, 1
        %s215 = smul.addr %s212, 2
        %s216 = sadd.s32 %s214, %s215
        %s217 = scalar_lea.vmem %s1, %s216
        %p218 = pneg %p83
        %p219 = pneg %p80
        %p220 = pneg %p104
        %p221 = pneg %p101
        %p222 = pneg %p132
        %p223 = pneg %p129
        %s224 = sand.u32 %s119, 1
        %s225 = scalar_lea.sflag [#allocation4], %s224
        %s226 = sand.u32 %s119, 1
        %s227 = scalar_lea.vmem [#allocation5], %s226
        %s228 = smul.u32 2, %s25
        %s229 = smul.u32 2, %s25
        %p230 = scmp.lt.s32.totalorder %s24, 1
        %s231 = scalar_select %p230, %s24, 1
        %p232 = scmp.lt.s32.totalorder %s229, 1
        %s233 = scalar_select %p232, %s229, 1
        %s234 = smul.addr %s231, 2
        %s235 = sadd.s32 %s233, %s234
        %s236 = scalar_lea.vmem %s1, %s235
        %s237 = smul.u32 2, %s25
        %s238 = sadd.s32 %s24, %s25
        %v239 = vld [vmem:[%s198] sm:$0xff]
        %v240 = vld [vmem:[%s236] sm:$0x3]
        %v242 = vcombine.high %v239, %v239
        %vm244 = vcmask 1043456
        %v245 = vsel %vm244, %v239, -inf
        %v246 = vrot.slane %v245, 4
        %v247 = vmax.f32 %v245, %v246
        %v248 = vrot.slane %v247, 2
        %v249 = vmax.f32 %v247, %v248
        %v250 = vrot.slane %v249, 1
        %v251 = vmax.f32 %v249, %v250
        %v252 = vsel %vm244, %v242, -inf
        %v253 = vrot.slane %v252, 4
        %v254 = vmax.f32 %v252, %v253
        %v255 = vrot.slane %v254, 2
        %v256 = vmax.f32 %v254, %v255
        %v257 = vrot.slane %v256, 1
        %v258 = vmax.f32 %v256, %v257
        %v261 = vcombine.low %v251, %v258
        %v263 = vsub.f32 %v239, %v261
        %v264 = vmul.f32 %v263, 1.442695
        %v265 = vpow.pop %v264
        %v267 = vcombine.high %v265, %v265
        %v269 = vsel %vm244, %v265, 0.0
        %v270 = vrot.slane %v269, 4
        %v271 = vadd.f32 %v269, %v270
        %v272 = vrot.slane %v271, 2
        %v273 = vadd.f32 %v271, %v272
        %v274 = vrot.slane %v273, 1
        %v275 = vadd.f32 %v273, %v274
        %v276 = vsel %vm244, %v267, 0.0
        %v277 = vrot.slane %v276, 4
        %v278 = vadd.f32 %v276, %v277
        %v279 = vrot.slane %v278, 2
        %v280 = vadd.f32 %v278, %v279
        %v281 = vrot.slane %v280, 1
        %v282 = vadd.f32 %v280, %v281
        %v283 = vlog2.pop %v275
        %v284 = vmul.f32 %v283, 0.6931472
        %v285 = vlog2.pop %v282
        %v286 = vmul.f32 %v285, 0.6931472
        %v287 = vlaneseq
        %v288 = vshrl.u32 %v287, 7
        %v289 = vlaneseq
        %v290 = vshrl.u32 %v289, 7
        %v291 = vsub.s32 0, %v290
        %v292 = vrot.slane %v240, %v291
        %v293 = vlaneseq
        %v294 = vshrl.u32 %v293, 7
        %v295 = vsub.s32 1, %v294
        %v296 = vrot.slane %v240, %v295
        %vm297 = vcmp.eq.s32.totalorder %v288, %v292
        %vm298 = vcmp.eq.s32.totalorder %v288, %v296
        %v299 = vsel %vm297, 1, 0
        %v300 = vsel %vm298, 1, 0
        %v301 = vcvt.s32.f32 %v299
        %v302 = vcvt.s32.f32 %v300
        %v305 = vcombine.low %v301, %v302
        %v307 = vmul.f32 %v263, %v305
        %v309 = vcombine.high %v307, %v307
        %v311 = vsel %vm244, %v307, 0.0
        %v312 = vrot.slane %v311, 4
        %v313 = vadd.f32 %v311, %v312
        %v314 = vrot.slane %v313, 2
        %v315 = vadd.f32 %v313, %v314
        %v316 = vrot.slane %v315, 1
        %v317 = vadd.f32 %v315, %v316
        %v318 = vsel %vm244, %v309, 0.0
        %v319 = vrot.slane %v318, 4
        %v320 = vadd.f32 %v318, %v319
        %v321 = vrot.slane %v320, 2
        %v322 = vadd.f32 %v320, %v321
        %v323 = vrot.slane %v322, 1
        %v324 = vadd.f32 %v322, %v323
        %v325 = vsub.f32 %v317, %v284
        %v326 = vsub.f32 %v324, %v286
        %v327 = vmul.f32 %v325, 1.442695
        %v328 = vpow.pop %v327
        %v329 = vmul.f32 %v326, 1.442695
        %v330 = vpow.pop %v329
        %v331 = vsub.f32 1.0, %v328
        %v332 = vsub.f32 1.0, %v330
        %v333 = vmax.f32 %v331, 0.0
        %v334 = vmax.f32 %v332, 0.0
        %v335 = vmul.f32 %v333, %v333
        %v336 = vmul.f32 %v334, %v334
        %v337 = vmul.f32 %v335, -1.0
        %v338 = vmul.f32 %v336, -1.0
        %v339 = vmul.f32 %v337, %v325
        %v340 = vmul.f32 %v338, %v326
        %s341 = smul.u32 %s25, 256
        %v342 = vlaneseq
        %v343 = vand.u32 %v342, 127
        %v344 = vadd.s32 %v343, 128
        %v345 = vstv %s341
        %v346 = vadd.s32 %v345, %v343
        %v347 = vadd.s32 %v345, %v344
        %vm348 = vcmp.lt.s32.totalorder %v346, 256
        %vm349 = vcmp.lt.s32.totalorder %v347, 256
        %v350 = vsel %vm348, %v339, 0.0
        %v351 = vsel %vm349, %v340, 0.0
        %v352 = vadd.f32 %v350, %v351
        %353 = vadd.xlane.f32.xlu0 %v352
        %v354 = vpop.xlane.xlu0 %353
        %vm355 = vcmp.eq.s32.totalorder %v343, 0
        %v356 = vsel %vm355, %v354, 0.0
        %357 = vst [vmem:[%s227] sm:$0x1] %v356
        %s358 = sand.u32 %s119, 1
        %s359 = scalar_lea.sflag [#allocation4], %s358
        %s360 = sand.u32 %s119, 1
        %s361 = scalar_lea.vmem [#allocation5], %s360
        // Predicated region
        $region37: #{tpu_custom_call.1} parent=31 // pred_check
          %p362 = pneg %p129
        $region38: #{tpu_custom_call.1} parent=31 // pred_check_branch
          %364 = sbr.rel (%p362) target = $region40
        $region39: #{tpu_custom_call.1} parent=31 // pred_region
          %s365 = sadd.s32 %s24, %s25
          %s367 = ssub.s32 16, 16
          %368 = vsyncadd %s359, %s367
          %s369 = smul.addr %s365, 16
          %s370 = scalar_lea.hbm %s3, %s369
          %s372 = sshll.u32 %s361, 4
          %s373 = int_to_ptr.vmem [resolvable:$true] %s372
          %375 = dma.vmem_to_hbm [thread:$0]  %s373, 16, %s370, %s359
        $region40: #{tpu_custom_call.1} parent=31 // pred_fallthru
          _
      $region32: #{tpu_custom_call.1} parent=5 // pred_fallthru
        _
      %p376 = scmp.le.s32.totalorder 2, %s15
      // Predicated region
      $region41: #{tpu_custom_call.1} parent=5 // pred_check
        %p377 = pneg %p376
      $region42: #{tpu_custom_call.1} parent=5 // pred_check_branch
        %379 = sbr.rel (%p377) target = $region44
      $region43: #{tpu_custom_call.1} parent=5 // pred_region
        %s380 = ssub.s32 %s15, 2
        // Predicated region
        $region45: #{tpu_custom_call.1} parent=43 // pred_check
          %p381 = pneg %p135
        $region46: #{tpu_custom_call.1} parent=43 // pred_check_branch
          %383 = sbr.rel (%p381) target = $region48
        $region47: #{tpu_custom_call.1} parent=43 // pred_region
          %s384 = sand.u32 %s120, 1
          %s385 = scalar_lea.sflag [#allocation4], %s384
          %s386 = sand.u32 %s120, 1
          %s387 = scalar_lea.vmem [#allocation5], %s386
          %388 = dma.done %s385, 16
        $region48: #{tpu_custom_call.1} parent=43 // pred_fallthru
          _
      $region44: #{tpu_custom_call.1} parent=5 // pred_fallthru
        _
    $region6: #{tpu_custom_call.1} parent=1 // loop_footer
      %s19 = sadd.s32 1, %s15
    $region7: #{tpu_custom_call.1} parent=1 // loop_footer_branch
      %14 = sbr.rel target = $region3
    $region8: #{tpu_custom_call.1} parent=1 // loop_exit
      _
    %389 = vsyncpa [#allocation3], 1
    %s390 = scalar_lea.sflag [#allocation3], 1
    %391 = vsyncpa %s390, 1
    %392 = vsyncpa [#allocation4], 1
    %s393 = scalar_lea.sflag [#allocation4], 1
    %394 = vsyncpa %s393, 1

</llo_original>
